<compile_context>
chip_gen: v7x
topology: tpu7x:2x2x1
jax: 0.10.0
libtpu: 0.0.40
codegen_flags: <defaults>
</compile_context>

<pallas_src>
import functools

import jax
import jax.numpy as jnp
from jax.experimental import pallas as pl
from jax.experimental.pallas import tpu as pltpu


def _slab_layout(I, H, O):
    """Static row offsets of the packed parameter slab (shared by packer and
    kernel). All rows are 4H lanes wide (lane-dense for H=32 -> 128 lanes)."""
    r_wih = 0                      # rows [0, I):        w_ih  (I, 4H)
    r_b = I                        # row  I:             fused bias (1, 4H)
    r_wlin = r_b + 1               # rows [.., ..+O):    linear weight rows, lanes [0, H)
    r_blin = r_wlin + O            # row:                linear bias, lanes [0, O)
    r_s1 = r_blin + 1              # rows: per-lane activation constants
    r_s2 = r_s1 + 1
    r_s3 = r_s2 + 1
    r_whh = ((r_s3 + 1 + 7) // 8) * 8          # w_hh aligned to a sublane boundary
    n_rows = ((r_whh + H + 7) // 8) * 8        # pad total rows to a multiple of 8
    return dict(r_wih=r_wih, r_b=r_b, r_wlin=r_wlin, r_blin=r_blin,
                r_s1=r_s1, r_s2=r_s2, r_s3=r_s3, r_whh=r_whh, n_rows=n_rows)


def _lstm_kernel(x_ref, slab_ref, out_ref, *, T, I, H, O):
    """Whole LSTM recurrence + final linear in one invocation.

    x_ref:    (T*I,)        SMEM  input sequence (scalar reads)
    slab_ref: (n_rows, 4H)  VMEM  packed parameters (see _slab_layout)
    out_ref:  (1, O)        VMEM  linear(h_T) == predictions[-1]
    """
    L = _slab_layout(I, H, O)

    # ---- hoisted, loop-invariant loads (a handful of vregs) ----------------
    w_ih_rows = [slab_ref[L["r_wih"] + j:L["r_wih"] + j + 1, :] for j in range(I)]
    b = slab_ref[L["r_b"]:L["r_b"] + 1, :]                      # (1, 4H) fused bias
    s1 = slab_ref[L["r_s1"]:L["r_s1"] + 1, :]                   # per-lane act consts
    s2 = slab_ref[L["r_s2"]:L["r_s2"] + 1, :]
    s3 = slab_ref[L["r_s3"]:L["r_s3"] + 1, :]
    # bf16 operands -> single-pass MXU matmul; accumulation stays f32.
    w_hh = slab_ref[L["r_whh"]:L["r_whh"] + H, :].astype(jnp.bfloat16)   # (H, 4H)

    h = jnp.zeros((1, H), jnp.float32)
    c = jnp.zeros((1, H), jnp.float32)

    # T is small and static: full Python unroll (live state is tiny, so no
    # register-pressure concern; lets the scheduler see across steps).
    for t in range(T):
        # Input projection: scalar-broadcast VPU FMA(s) from SMEM scalars
        # (no MXU, no sublane extract on the serial path).
        xp_t = b
        for j in range(I):
            xp_t = xp_t + x_ref[t * I + j] * w_ih_rows[j]
        # Recurrent matmul: (1,H)bf16 x (H,4H)bf16 -> (1,4H) f32 on the MXU.
        pre = xp_t + jnp.dot(h.astype(jnp.bfloat16), w_hh,
                             preferred_element_type=jnp.float32)
        # Gate order [i, f, o, g]: sigmoid(x) = 0.5*tanh(0.5x)+0.5 on the
        # [i,f,o] lanes, plain tanh on the g lanes -> ONE EUP tanh per step.
        act = s2 * jnp.tanh(s1 * pre) + s3
        i_g = act[:, 0 * H:1 * H]
        f_g = act[:, 1 * H:2 * H]
        o_g = act[:, 2 * H:3 * H]
        g_g = act[:, 3 * H:4 * H]
        c = f_g * c + i_g * g_g
        h = o_g * jnp.tanh(c)

    # Final linear: VPU multiply + lane reduce (avoid an M=1,K=H,N=1 MXU dot).
    w_lin = slab_ref[L["r_wlin"]:L["r_wlin"] + O, 0:H]           # (O, H)
    b_lin = slab_ref[L["r_blin"]:L["r_blin"] + 1, 0:O]           # (1, O)
    if O == 1:
        out = jnp.sum(h * w_lin, axis=-1, keepdims=True)         # (1, 1)
    else:
        out = jnp.dot(h, w_lin.T, preferred_element_type=jnp.float32)  # (1, O)
    out_ref[...] = (out + b_lin).astype(out_ref.dtype)


def init_params(key, input_size=1, hidden_layer_size=32, output_size=1):
    """PyTorch-default U(-1/sqrt(H), 1/sqrt(H)) init, re-packed into the fused
    right-multiplication layout and then into one lane-dense parameter slab."""
    H, I, O = hidden_layer_size, input_size, output_size
    G = 4 * H
    ks = jax.random.split(key, 6)
    bound = 1.0 / jnp.sqrt(jnp.array(H, jnp.float32))

    def u(k, shape):
        return jax.random.uniform(k, shape, jnp.float32, -bound, bound)

    # PyTorch parameter shapes; gate order [i, f, g, o] stacked along dim 0.
    weight_ih = u(ks[0], (4 * H, I))
    weight_hh = u(ks[1], (4 * H, H))
    bias_ih = u(ks[2], (4 * H,))
    bias_hh = u(ks[3], (4 * H,))
    lin_w = u(ks[4], (O, H))
    lin_b = u(ks[5], (O,))

    # Re-pack gates to [i, f, o, g] and fuse into lane-dense right-mul matrices.
    perm = jnp.array([0, 1, 3, 2])  # pytorch [i,f,g,o] -> kernel [i,f,o,g]
    w_ih = jnp.transpose(weight_ih.reshape(4, H, I)[perm], (2, 0, 1)).reshape(I, G)
    w_hh = jnp.transpose(weight_hh.reshape(4, H, H)[perm], (2, 0, 1)).reshape(H, G)
    b = (bias_ih + bias_hh).reshape(4, H)[perm].reshape(1, G)

    # Pack everything into one lane-dense f32 slab -> a single input DMA.
    L = _slab_layout(I, H, O)
    lane = jnp.arange(G)
    sig = lane < 3 * H             # sigmoid lanes [i,f,o); tanh lanes [g)
    slab = jnp.zeros((L["n_rows"], G), jnp.float32)
    slab = slab.at[L["r_wih"]:L["r_wih"] + I, :].set(w_ih)
    slab = slab.at[L["r_b"], :].set(b[0])
    slab = slab.at[L["r_wlin"]:L["r_wlin"] + O, 0:H].set(lin_w)
    slab = slab.at[L["r_blin"], 0:O].set(lin_b)
    slab = slab.at[L["r_s1"], :].set(jnp.where(sig, 0.5, 1.0))
    slab = slab.at[L["r_s2"], :].set(jnp.where(sig, 0.5, 1.0))
    slab = slab.at[L["r_s3"], :].set(jnp.where(sig, 0.5, 0.0))
    slab = slab.at[L["r_whh"]:L["r_whh"] + H, :].set(w_hh)

    return dict(
        slab=slab, I=I, H=H, O=O,
        # fused-layout copies kept only for the pure-JAX reference:
        w_ih=w_ih, w_hh=w_hh, b=b, w_lin=lin_w.T, b_lin=lin_b.reshape(1, O),
    )


def lstm_forward(x, params):
    """x: (T, input_size) float32 -> (output_size,)  (== predictions[-1])."""
    T, I = x.shape
    H, O = params["H"], params["O"]
    assert I == params["I"]
    kernel = functools.partial(_lstm_kernel, T=T, I=I, H=H, O=O)
    out = pl.pallas_call(
        kernel,
        out_shape=jax.ShapeDtypeStruct((1, O), jnp.float32),
        in_specs=[
            pl.BlockSpec(memory_space=pltpu.MemorySpace.SMEM),   # x: scalar reads
            pl.BlockSpec(memory_space=pltpu.MemorySpace.VMEM),   # packed param slab
        ],
        out_specs=pl.BlockSpec(memory_space=pltpu.MemorySpace.VMEM),
    )(x.reshape(-1), params["slab"])
    return out[0]


def lstm_reference(x, params):
    """Pure-JAX reference of the same forward pass (exact sigmoid, all f32)."""
    H = params["H"]
    h = jnp.zeros((1, H), jnp.float32)
    c = jnp.zeros((1, H), jnp.float32)
    for t in range(x.shape[0]):
        x_t = x[t:t + 1, :]
        pre = x_t @ params["w_ih"] + h @ params["w_hh"] + params["b"]  # (1, 4H)
        i = jax.nn.sigmoid(pre[:, 0 * H:1 * H])
        f = jax.nn.sigmoid(pre[:, 1 * H:2 * H])
        o = jax.nn.sigmoid(pre[:, 2 * H:3 * H])
        g = jnp.tanh(pre[:, 3 * H:4 * H])
        c = f * c + i * g
        h = o * jnp.tanh(c)
    return (h @ params["w_lin"] + params["b_lin"])[0]


if __name__ == "__main__":
    key = jax.random.PRNGKey(0)
    k_param, k_x = jax.random.split(key)

    seq_len, input_size, hidden, output_size = 8, 1, 32, 1
    params = init_params(k_param, input_size, hidden, output_size)
    x = jax.random.normal(k_x, (seq_len, input_size), jnp.float32)

    pred = jax.block_until_ready(lstm_forward(x, params))
    ref = jax.block_until_ready(lstm_reference(x, params))

    assert pred.shape == (output_size,)
    # Tolerance slightly relaxed vs. an all-f32 kernel: the recurrent matmul
    # now uses bf16 operands (f32 accumulation); observed error is ~1e-4.
    assert jnp.allclose(pred, ref, rtol=5e-3, atol=5e-3)
    print("KERNEL_OK")
</pallas_src>

<mosaic_0001>
module attributes {stable_mosaic.version = 11 : i64} {
  func.func @_lstm_kernel(%arg0: memref<8xf32, #tpu.memory_space<smem>>, %arg1: memref<40x128xf32, #tpu.memory_space<vmem>>, %arg2: memref<1x1xf32, #tpu.memory_space<vmem>>) attributes {dimension_semantics = [], scalar_prefetch = 0 : i64, scratch_operands = 0 : i64, tpu.core_type = #tpu.core_type<tc>} {
    %c0 = arith.constant 0 : index
    %c0_0 = arith.constant 0 : index
    %0 = vector.load %arg1[%c0, %c0_0] : memref<40x128xf32, #tpu.memory_space<vmem>>, vector<1x128xf32>
    %c1 = arith.constant 1 : index
    %c0_1 = arith.constant 0 : index
    %1 = vector.load %arg1[%c1, %c0_1] : memref<40x128xf32, #tpu.memory_space<vmem>>, vector<1x128xf32>
    %c4 = arith.constant 4 : index
    %c0_2 = arith.constant 0 : index
    %2 = vector.load %arg1[%c4, %c0_2] : memref<40x128xf32, #tpu.memory_space<vmem>>, vector<1x128xf32>
    %c5 = arith.constant 5 : index
    %c0_3 = arith.constant 0 : index
    %3 = vector.load %arg1[%c5, %c0_3] : memref<40x128xf32, #tpu.memory_space<vmem>>, vector<1x128xf32>
    %c6 = arith.constant 6 : index
    %c0_4 = arith.constant 0 : index
    %4 = vector.load %arg1[%c6, %c0_4] : memref<40x128xf32, #tpu.memory_space<vmem>>, vector<1x128xf32>
    %c8 = arith.constant 8 : index
    %c0_5 = arith.constant 0 : index
    %5 = vector.load %arg1[%c8, %c0_5] : memref<40x128xf32, #tpu.memory_space<vmem>>, vector<32x128xf32>
    %6 = arith.truncf %5 : vector<32x128xf32> to vector<32x128xbf16>
    %cst = arith.constant 0.000000e+00 : f32
    %7 = vector.broadcast %cst : f32 to vector<1x32xf32>
    %cst_6 = arith.constant 0.000000e+00 : f32
    %8 = vector.broadcast %cst_6 : f32 to vector<1x32xf32>
    %c0_7 = arith.constant 0 : index
    %9 = memref.load %arg0[%c0_7] : memref<8xf32, #tpu.memory_space<smem>>
    %10 = vector.broadcast %9 : f32 to vector<1x128xf32>
    %11 = arith.mulf %10, %0 : vector<1x128xf32>
    %12 = arith.addf %1, %11 : vector<1x128xf32>
    %13 = arith.truncf %7 : vector<1x32xf32> to vector<1x32xbf16>
    %cst_8 = arith.constant dense<0.000000e+00> : vector<1x128xf32>
    %14 = tpu.matmul %13, %6, %cst_8 {dimension_numbers = #tpu.dot_dimension_numbers<[1], [0], [0], [1], [0, 0, 1, 1], [], []>} : vector<1x32xbf16>, vector<32x128xbf16>, vector<1x128xf32> -> vector<1x128xf32>
    %15 = arith.addf %12, %14 : vector<1x128xf32>
    %16 = arith.mulf %2, %15 : vector<1x128xf32>
    %17 = math.tanh %16 : vector<1x128xf32>
    %18 = arith.mulf %3, %17 : vector<1x128xf32>
    %19 = arith.addf %18, %4 : vector<1x128xf32>
    %20 = vector.extract_strided_slice %19 {offsets = [0, 0], sizes = [1, 32], strides = [1, 1]} : vector<1x128xf32> to vector<1x32xf32>
    %21 = vector.extract_strided_slice %19 {offsets = [0, 32], sizes = [1, 32], strides = [1, 1]} : vector<1x128xf32> to vector<1x32xf32>
    %22 = vector.extract_strided_slice %19 {offsets = [0, 64], sizes = [1, 32], strides = [1, 1]} : vector<1x128xf32> to vector<1x32xf32>
    %23 = vector.extract_strided_slice %19 {offsets = [0, 96], sizes = [1, 32], strides = [1, 1]} : vector<1x128xf32> to vector<1x32xf32>
    %24 = arith.mulf %21, %8 : vector<1x32xf32>
    %25 = arith.mulf %20, %23 : vector<1x32xf32>
    %26 = arith.addf %24, %25 : vector<1x32xf32>
    %27 = math.tanh %26 : vector<1x32xf32>
    %28 = arith.mulf %22, %27 : vector<1x32xf32>
    %c1_9 = arith.constant 1 : index
    %29 = memref.load %arg0[%c1_9] : memref<8xf32, #tpu.memory_space<smem>>
    %30 = vector.broadcast %29 : f32 to vector<1x128xf32>
    %31 = arith.mulf %30, %0 : vector<1x128xf32>
    %32 = arith.addf %1, %31 : vector<1x128xf32>
    %33 = arith.truncf %28 : vector<1x32xf32> to vector<1x32xbf16>
    %cst_10 = arith.constant dense<0.000000e+00> : vector<1x128xf32>
    %34 = tpu.matmul %33, %6, %cst_10 {dimension_numbers = #tpu.dot_dimension_numbers<[1], [0], [0], [1], [0, 0, 1, 1], [], []>} : vector<1x32xbf16>, vector<32x128xbf16>, vector<1x128xf32> -> vector<1x128xf32>
    %35 = arith.addf %32, %34 : vector<1x128xf32>
    %36 = arith.mulf %2, %35 : vector<1x128xf32>
    %37 = math.tanh %36 : vector<1x128xf32>
    %38 = arith.mulf %3, %37 : vector<1x128xf32>
    %39 = arith.addf %38, %4 : vector<1x128xf32>
    %40 = vector.extract_strided_slice %39 {offsets = [0, 0], sizes = [1, 32], strides = [1, 1]} : vector<1x128xf32> to vector<1x32xf32>
    %41 = vector.extract_strided_slice %39 {offsets = [0, 32], sizes = [1, 32], strides = [1, 1]} : vector<1x128xf32> to vector<1x32xf32>
    %42 = vector.extract_strided_slice %39 {offsets = [0, 64], sizes = [1, 32], strides = [1, 1]} : vector<1x128xf32> to vector<1x32xf32>
    %43 = vector.extract_strided_slice %39 {offsets = [0, 96], sizes = [1, 32], strides = [1, 1]} : vector<1x128xf32> to vector<1x32xf32>
    %44 = arith.mulf %41, %26 : vector<1x32xf32>
    %45 = arith.mulf %40, %43 : vector<1x32xf32>
    %46 = arith.addf %44, %45 : vector<1x32xf32>
    %47 = math.tanh %46 : vector<1x32xf32>
    %48 = arith.mulf %42, %47 : vector<1x32xf32>
    %c2 = arith.constant 2 : index
    %49 = memref.load %arg0[%c2] : memref<8xf32, #tpu.memory_space<smem>>
    %50 = vector.broadcast %49 : f32 to vector<1x128xf32>
    %51 = arith.mulf %50, %0 : vector<1x128xf32>
    %52 = arith.addf %1, %51 : vector<1x128xf32>
    %53 = arith.truncf %48 : vector<1x32xf32> to vector<1x32xbf16>
    %cst_11 = arith.constant dense<0.000000e+00> : vector<1x128xf32>
    %54 = tpu.matmul %53, %6, %cst_11 {dimension_numbers = #tpu.dot_dimension_numbers<[1], [0], [0], [1], [0, 0, 1, 1], [], []>} : vector<1x32xbf16>, vector<32x128xbf16>, vector<1x128xf32> -> vector<1x128xf32>
    %55 = arith.addf %52, %54 : vector<1x128xf32>
    %56 = arith.mulf %2, %55 : vector<1x128xf32>
    %57 = math.tanh %56 : vector<1x128xf32>
    %58 = arith.mulf %3, %57 : vector<1x128xf32>
    %59 = arith.addf %58, %4 : vector<1x128xf32>
    %60 = vector.extract_strided_slice %59 {offsets = [0, 0], sizes = [1, 32], strides = [1, 1]} : vector<1x128xf32> to vector<1x32xf32>
    %61 = vector.extract_strided_slice %59 {offsets = [0, 32], sizes = [1, 32], strides = [1, 1]} : vector<1x128xf32> to vector<1x32xf32>
    %62 = vector.extract_strided_slice %59 {offsets = [0, 64], sizes = [1, 32], strides = [1, 1]} : vector<1x128xf32> to vector<1x32xf32>
    %63 = vector.extract_strided_slice %59 {offsets = [0, 96], sizes = [1, 32], strides = [1, 1]} : vector<1x128xf32> to vector<1x32xf32>
    %64 = arith.mulf %61, %46 : vector<1x32xf32>
    %65 = arith.mulf %60, %63 : vector<1x32xf32>
    %66 = arith.addf %64, %65 : vector<1x32xf32>
    %67 = math.tanh %66 : vector<1x32xf32>
    %68 = arith.mulf %62, %67 : vector<1x32xf32>
    %c3 = arith.constant 3 : index
    %69 = memref.load %arg0[%c3] : memref<8xf32, #tpu.memory_space<smem>>
    %70 = vector.broadcast %69 : f32 to vector<1x128xf32>
    %71 = arith.mulf %70, %0 : vector<1x128xf32>
    %72 = arith.addf %1, %71 : vector<1x128xf32>
    %73 = arith.truncf %68 : vector<1x32xf32> to vector<1x32xbf16>
    %cst_12 = arith.constant dense<0.000000e+00> : vector<1x128xf32>
    %74 = tpu.matmul %73, %6, %cst_12 {dimension_numbers = #tpu.dot_dimension_numbers<[1], [0], [0], [1], [0, 0, 1, 1], [], []>} : vector<1x32xbf16>, vector<32x128xbf16>, vector<1x128xf32> -> vector<1x128xf32>
    %75 = arith.addf %72, %74 : vector<1x128xf32>
    %76 = arith.mulf %2, %75 : vector<1x128xf32>
    %77 = math.tanh %76 : vector<1x128xf32>
    %78 = arith.mulf %3, %77 : vector<1x128xf32>
    %79 = arith.addf %78, %4 : vector<1x128xf32>
    %80 = vector.extract_strided_slice %79 {offsets = [0, 0], sizes = [1, 32], strides = [1, 1]} : vector<1x128xf32> to vector<1x32xf32>
    %81 = vector.extract_strided_slice %79 {offsets = [0, 32], sizes = [1, 32], strides = [1, 1]} : vector<1x128xf32> to vector<1x32xf32>
    %82 = vector.extract_strided_slice %79 {offsets = [0, 64], sizes = [1, 32], strides = [1, 1]} : vector<1x128xf32> to vector<1x32xf32>
    %83 = vector.extract_strided_slice %79 {offsets = [0, 96], sizes = [1, 32], strides = [1, 1]} : vector<1x128xf32> to vector<1x32xf32>
    %84 = arith.mulf %81, %66 : vector<1x32xf32>
    %85 = arith.mulf %80, %83 : vector<1x32xf32>
    %86 = arith.addf %84, %85 : vector<1x32xf32>
    %87 = math.tanh %86 : vector<1x32xf32>
    %88 = arith.mulf %82, %87 : vector<1x32xf32>
    %c4_13 = arith.constant 4 : index
    %89 = memref.load %arg0[%c4_13] : memref<8xf32, #tpu.memory_space<smem>>
    %90 = vector.broadcast %89 : f32 to vector<1x128xf32>
    %91 = arith.mulf %90, %0 : vector<1x128xf32>
    %92 = arith.addf %1, %91 : vector<1x128xf32>
    %93 = arith.truncf %88 : vector<1x32xf32> to vector<1x32xbf16>
    %cst_14 = arith.constant dense<0.000000e+00> : vector<1x128xf32>
    %94 = tpu.matmul %93, %6, %cst_14 {dimension_numbers = #tpu.dot_dimension_numbers<[1], [0], [0], [1], [0, 0, 1, 1], [], []>} : vector<1x32xbf16>, vector<32x128xbf16>, vector<1x128xf32> -> vector<1x128xf32>
    %95 = arith.addf %92, %94 : vector<1x128xf32>
    %96 = arith.mulf %2, %95 : vector<1x128xf32>
    %97 = math.tanh %96 : vector<1x128xf32>
    %98 = arith.mulf %3, %97 : vector<1x128xf32>
    %99 = arith.addf %98, %4 : vector<1x128xf32>
    %100 = vector.extract_strided_slice %99 {offsets = [0, 0], sizes = [1, 32], strides = [1, 1]} : vector<1x128xf32> to vector<1x32xf32>
    %101 = vector.extract_strided_slice %99 {offsets = [0, 32], sizes = [1, 32], strides = [1, 1]} : vector<1x128xf32> to vector<1x32xf32>
    %102 = vector.extract_strided_slice %99 {offsets = [0, 64], sizes = [1, 32], strides = [1, 1]} : vector<1x128xf32> to vector<1x32xf32>
    %103 = vector.extract_strided_slice %99 {offsets = [0, 96], sizes = [1, 32], strides = [1, 1]} : vector<1x128xf32> to vector<1x32xf32>
    %104 = arith.mulf %101, %86 : vector<1x32xf32>
    %105 = arith.mulf %100, %103 : vector<1x32xf32>
    %106 = arith.addf %104, %105 : vector<1x32xf32>
    %107 = math.tanh %106 : vector<1x32xf32>
    %108 = arith.mulf %102, %107 : vector<1x32xf32>
    %c5_15 = arith.constant 5 : index
    %109 = memref.load %arg0[%c5_15] : memref<8xf32, #tpu.memory_space<smem>>
    %110 = vector.broadcast %109 : f32 to vector<1x128xf32>
    %111 = arith.mulf %110, %0 : vector<1x128xf32>
    %112 = arith.addf %1, %111 : vector<1x128xf32>
    %113 = arith.truncf %108 : vector<1x32xf32> to vector<1x32xbf16>
    %cst_16 = arith.constant dense<0.000000e+00> : vector<1x128xf32>
    %114 = tpu.matmul %113, %6, %cst_16 {dimension_numbers = #tpu.dot_dimension_numbers<[1], [0], [0], [1], [0, 0, 1, 1], [], []>} : vector<1x32xbf16>, vector<32x128xbf16>, vector<1x128xf32> -> vector<1x128xf32>
    %115 = arith.addf %112, %114 : vector<1x128xf32>
    %116 = arith.mulf %2, %115 : vector<1x128xf32>
    %117 = math.tanh %116 : vector<1x128xf32>
    %118 = arith.mulf %3, %117 : vector<1x128xf32>
    %119 = arith.addf %118, %4 : vector<1x128xf32>
    %120 = vector.extract_strided_slice %119 {offsets = [0, 0], sizes = [1, 32], strides = [1, 1]} : vector<1x128xf32> to vector<1x32xf32>
    %121 = vector.extract_strided_slice %119 {offsets = [0, 32], sizes = [1, 32], strides = [1, 1]} : vector<1x128xf32> to vector<1x32xf32>
    %122 = vector.extract_strided_slice %119 {offsets = [0, 64], sizes = [1, 32], strides = [1, 1]} : vector<1x128xf32> to vector<1x32xf32>
    %123 = vector.extract_strided_slice %119 {offsets = [0, 96], sizes = [1, 32], strides = [1, 1]} : vector<1x128xf32> to vector<1x32xf32>
    %124 = arith.mulf %121, %106 : vector<1x32xf32>
    %125 = arith.mulf %120, %123 : vector<1x32xf32>
    %126 = arith.addf %124, %125 : vector<1x32xf32>
    %127 = math.tanh %126 : vector<1x32xf32>
    %128 = arith.mulf %122, %127 : vector<1x32xf32>
    %c6_17 = arith.constant 6 : index
    %129 = memref.load %arg0[%c6_17] : memref<8xf32, #tpu.memory_space<smem>>
    %130 = vector.broadcast %129 : f32 to vector<1x128xf32>
    %131 = arith.mulf %130, %0 : vector<1x128xf32>
    %132 = arith.addf %1, %131 : vector<1x128xf32>
    %133 = arith.truncf %128 : vector<1x32xf32> to vector<1x32xbf16>
    %cst_18 = arith.constant dense<0.000000e+00> : vector<1x128xf32>
    %134 = tpu.matmul %133, %6, %cst_18 {dimension_numbers = #tpu.dot_dimension_numbers<[1], [0], [0], [1], [0, 0, 1, 1], [], []>} : vector<1x32xbf16>, vector<32x128xbf16>, vector<1x128xf32> -> vector<1x128xf32>
    %135 = arith.addf %132, %134 : vector<1x128xf32>
    %136 = arith.mulf %2, %135 : vector<1x128xf32>
    %137 = math.tanh %136 : vector<1x128xf32>
    %138 = arith.mulf %3, %137 : vector<1x128xf32>
    %139 = arith.addf %138, %4 : vector<1x128xf32>
    %140 = vector.extract_strided_slice %139 {offsets = [0, 0], sizes = [1, 32], strides = [1, 1]} : vector<1x128xf32> to vector<1x32xf32>
    %141 = vector.extract_strided_slice %139 {offsets = [0, 32], sizes = [1, 32], strides = [1, 1]} : vector<1x128xf32> to vector<1x32xf32>
    %142 = vector.extract_strided_slice %139 {offsets = [0, 64], sizes = [1, 32], strides = [1, 1]} : vector<1x128xf32> to vector<1x32xf32>
    %143 = vector.extract_strided_slice %139 {offsets = [0, 96], sizes = [1, 32], strides = [1, 1]} : vector<1x128xf32> to vector<1x32xf32>
    %144 = arith.mulf %141, %126 : vector<1x32xf32>
    %145 = arith.mulf %140, %143 : vector<1x32xf32>
    %146 = arith.addf %144, %145 : vector<1x32xf32>
    %147 = math.tanh %146 : vector<1x32xf32>
    %148 = arith.mulf %142, %147 : vector<1x32xf32>
    %c7 = arith.constant 7 : index
    %149 = memref.load %arg0[%c7] : memref<8xf32, #tpu.memory_space<smem>>
    %150 = vector.broadcast %149 : f32 to vector<1x128xf32>
    %151 = arith.mulf %150, %0 : vector<1x128xf32>
    %152 = arith.addf %1, %151 : vector<1x128xf32>
    %153 = arith.truncf %148 : vector<1x32xf32> to vector<1x32xbf16>
    %cst_19 = arith.constant dense<0.000000e+00> : vector<1x128xf32>
    %154 = tpu.matmul %153, %6, %cst_19 {dimension_numbers = #tpu.dot_dimension_numbers<[1], [0], [0], [1], [0, 0, 1, 1], [], []>} : vector<1x32xbf16>, vector<32x128xbf16>, vector<1x128xf32> -> vector<1x128xf32>
    %155 = arith.addf %152, %154 : vector<1x128xf32>
    %156 = arith.mulf %2, %155 : vector<1x128xf32>
    %157 = math.tanh %156 : vector<1x128xf32>
    %158 = arith.mulf %3, %157 : vector<1x128xf32>
    %159 = arith.addf %158, %4 : vector<1x128xf32>
    %160 = vector.extract_strided_slice %159 {offsets = [0, 0], sizes = [1, 32], strides = [1, 1]} : vector<1x128xf32> to vector<1x32xf32>
    %161 = vector.extract_strided_slice %159 {offsets = [0, 32], sizes = [1, 32], strides = [1, 1]} : vector<1x128xf32> to vector<1x32xf32>
    %162 = vector.extract_strided_slice %159 {offsets = [0, 64], sizes = [1, 32], strides = [1, 1]} : vector<1x128xf32> to vector<1x32xf32>
    %163 = vector.extract_strided_slice %159 {offsets = [0, 96], sizes = [1, 32], strides = [1, 1]} : vector<1x128xf32> to vector<1x32xf32>
    %164 = arith.mulf %161, %146 : vector<1x32xf32>
    %165 = arith.mulf %160, %163 : vector<1x32xf32>
    %166 = arith.addf %164, %165 : vector<1x32xf32>
    %167 = math.tanh %166 : vector<1x32xf32>
    %168 = arith.mulf %162, %167 : vector<1x32xf32>
    %c2_20 = arith.constant 2 : index
    %c0_21 = arith.constant 0 : index
    %169 = vector.load %arg1[%c2_20, %c0_21] : memref<40x128xf32, #tpu.memory_space<vmem>>, vector<1x32xf32>
    %c3_22 = arith.constant 3 : index
    %c0_23 = arith.constant 0 : index
    %170 = vector.load %arg1[%c3_22, %c0_23] : memref<40x128xf32, #tpu.memory_space<vmem>>, vector<1x1xf32>
    %171 = arith.mulf %168, %169 : vector<1x32xf32>
    %cst_24 = arith.constant dense<0.000000e+00> : vector<1xf32>
    %172 = vector.multi_reduction <add>, %171, %cst_24 [1] : vector<1x32xf32> to vector<1xf32>
    %173 = vector.shape_cast %172 : vector<1xf32> to vector<1x1xf32>
    %174 = arith.addf %173, %170 : vector<1x1xf32>
    %c0_25 = arith.constant 0 : index
    %c0_26 = arith.constant 0 : index
    %175 = vector.load %arg2[%c0_25, %c0_26] : memref<1x1xf32, #tpu.memory_space<vmem>>, vector<1x1xf32>
    tpu.vector_store %arg2[%c0_25, %c0_26], %174 {strides = array<i32>} : memref<1x1xf32, #tpu.memory_space<vmem>>, vector<1x1xf32>,
    return
  }
}

</mosaic_0001>

<llo_original>
// kernel: tpu_custom_call.1
$region0: #{tpu_custom_call.1}
  #allocation0 [shape = 'u32[]', space=smem, size = 0x4, offset = 0x4, fixed_abs, tag = 'smem constant byte address 0x4 - core index']
  #allocation1 [shape = 'u32[144,128]{1,0:T(1,128)}', space=vmem, size = 0x12000, scoped, tag = 'internal scratch']
  %s0 = inlined_call_operand.hbm [shape: f32[8], index: 0, kind: input, shape index: {}]
  %s1 = inlined_call_operand.hbm [shape: f32[40,128], index: 1, kind: input, shape index: {}]
  %s2 = inlined_call_operand.hbm [shape: f32[1,1], index: 2, kind: output, shape index: {}]
  %s3 = sld [smem:[#allocation0]]
  $region26: #{tpu_custom_call.1} parent=0
    _
  %s5 = ssub.s32 1, %s3
  %s6 = scalar_select 0, %s5, %s3
  $region1: #{tpu_custom_call.1} parent=0
    #allocation2 [shape = 'u8[512]{0}', space=smem, size = 0x200, scoped, tag = 'input window, operand 0, single buffered']
    #allocation3 [shape = 's32[1]{0}', space=sflag, size = 0x4, scoped, tag = 'scoped memory for tpu_custom_call.1']
    #allocation4 [shape = 's32[1]{0}', space=sflag, size = 0x4, scoped, tag = 'scoped memory for tpu_custom_call.1']
    #allocation5 [shape = 's32[1]{0}', space=sflag, size = 0x4, scoped, tag = 'scoped memory for tpu_custom_call.1']
    #allocation6 [shape = 'u8[20480]{0}', space=vmem, size = 0x5000, scoped, tag = 'input window, operand 1, single buffered']
    #allocation7 [shape = 'u8[512]{0}', space=vmem, size = 0x400, scoped, tag = 'output window, operand 0, single buffered']
    %7 = vsyncpa [#allocation5], 0
    %8 = vsyncpa [#allocation3], 0
    %9 = vsyncpa [#allocation4], 0
    // Predicated region
    $region2: #{tpu_custom_call.1} parent=1 // pred_check
      _
    $region3: #{tpu_custom_call.1} parent=1 // pred_check_branch
      %11 = sbr.rel (0) target = $region5
    $region4: #{tpu_custom_call.1} parent=1 // pred_region
      %s13 = ssub.s32 16, 16
      %14 = vsyncadd [#allocation5], %s13
      %17 = dma.hbm_to_smem %s0, 16, [#allocation2], [#allocation5]
    $region5: #{tpu_custom_call.1} parent=1 // pred_fallthru
      _
    // Predicated region
    $region6: #{tpu_custom_call.1} parent=1 // pred_check
      _
    $region7: #{tpu_custom_call.1} parent=1 // pred_check_branch
      %19 = sbr.rel (0) target = $region9
    $region8: #{tpu_custom_call.1} parent=1 // pred_region
      %s21 = ssub.s32 640, 640
      %22 = vsyncadd [#allocation3], %s21
      %s23 = sshll.u32 [#allocation6], 4
      %s24 = int_to_ptr.vmem [resolvable:$true] %s23
      %29 = dma.hbm_to_vmem [thread:$0]  %s1, 640, %s24, [#allocation3], 128, 128, 8
    $region9: #{tpu_custom_call.1} parent=1 // pred_fallthru
      _
    // Predicated region
    $region10: #{tpu_custom_call.1} parent=1 // pred_check
      _
    $region11: #{tpu_custom_call.1} parent=1 // pred_check_branch
      %31 = sbr.rel (0) target = $region13
    $region12: #{tpu_custom_call.1} parent=1 // pred_region
      %32 = dma.done [#allocation5], 16
    $region13: #{tpu_custom_call.1} parent=1 // pred_fallthru
      _
    // Predicated region
    $region14: #{tpu_custom_call.1} parent=1 // pred_check
      _
    $region15: #{tpu_custom_call.1} parent=1 // pred_check_branch
      %34 = sbr.rel (0) target = $region17
    $region16: #{tpu_custom_call.1} parent=1 // pred_region
      %35 = dma.done [#allocation3], 640
    $region17: #{tpu_custom_call.1} parent=1 // pred_fallthru
      _
    %36 = sfence
    %v38 = vld [vmem:[#allocation6] sm:$0x1]
    %v39 = vld [vmem:[#allocation6 + $0x1] sm:$0x1]
    %v40 = vld [vmem:[#allocation6 + $0x4] sm:$0x1]
    %v41 = vld [vmem:[#allocation6 + $0x5] sm:$0x1]
    %v42 = vld [vmem:[#allocation6 + $0x6] sm:$0x1]
    %v43 = vld [vmem:[#allocation6 + $0x8] sm:$0xff]
    %v44 = vld [vmem:[#allocation6 + $0x10] sm:$0xff]
    %v45 = vld [vmem:[#allocation6 + $0x18] sm:$0xff]
    %v46 = vld [vmem:[#allocation6 + $0x20] sm:$0xff]
    %v47 = vpack.c.bf16 %v44, %v43
    %v48 = vpack.c.bf16 %v46, %v45
    %s49 = sld [smem:[#allocation2]]
    %v50 = vstv %s49
    %v51 = vmul.f32 %v50, %v38
    %v52 = vadd.f32 %v39, %v51
    %vm53 = vcmask 261120
    %v55 = vsel %vm53, 0, 0
    %57 = vmatprep.subr.bf16.mxu0 0
    %58 = vmatpush1.bf16.msra.mxu0 %v47
    %59 = vmatprep.subr.bf16.mxu0 0
    %60 = vmatpush1.bf16.msra.mxu0 %v48
    %61 = vmatprep.subr.bf16.mxu0 0
    %62 = vmatpush1.bf16.msra.mxu0 0
    %63 = vmatprep.subr.bf16.mxu0 0
    %64 = vmatpush1.bf16.msra.mxu0 0
    %65 = vmatprep.subr.bf16.mxu0 0
    %66 = vmatpush1.bf16.msra.mxu0 0
    %67 = vmatprep.subr.bf16.mxu0 0
    %68 = vmatpush1.bf16.msra.mxu0 0
    %69 = vmatprep.subr.bf16.mxu0 0
    %70 = vmatpush1.bf16.msra.mxu0 0
    %71 = vmatprep.subr.bf16.mxu0 0
    %72 = vmatpush1.bf16.msra.mxu0 0
    %73 = vmatprep.subr.bf16.mxu0 0
    %74 = vmatpush1.bf16.msra.mxu0 0
    %75 = vmatprep.subr.bf16.mxu0 0
    %76 = vmatpush1.bf16.msra.mxu0 0
    %77 = vmatprep.subr.bf16.mxu0 0
    %78 = vmatpush1.bf16.msra.mxu0 0
    %79 = vmatprep.subr.bf16.mxu0 0
    %80 = vmatpush1.bf16.msra.mxu0 0
    %81 = vmatprep.subr.bf16.mxu0 0
    %82 = vmatpush1.bf16.msra.mxu0 0
    %83 = vmatprep.subr.bf16.mxu0 0
    %84 = vmatpush1.bf16.msra.mxu0 0
    %85 = vmatprep.subr.bf16.mxu0 0
    %86 = vmatpush1.bf16.msra.mxu0 0
    %87 = vmatprep.subr.bf16.mxu0 0
    %88 = vmatpush1.bf16.msra.mxu0 0
    %89 = vmatprep.mubr.bf16.mxu0 0
    %90 = vmatmul.mubr.bf16.gmra.mrb[0].mxu0 %v55
    %v91 = vpop.f32.mrb[0].mxu0
    %v92 = vadd.f32 0.0, %v91
    %v93 = vpop.f32.mrb[0].mxu0
    %v94 = vpop.f32.mrb[0].mxu0
    %v95 = vpop.f32.mrb[0].mxu0
    %96 = vdwg.mxu0
    %v97 = vadd.f32 %v52, %v92
    %v98 = vmul.f32 %v40, %v97
    %v99 = vtanh.pop %v98
    %v100 = vmul.f32 %v41, %v99
    %v101 = vadd.f32 %v100, %v42
    %v102 = vmul.f32 %v101, 0.0
    %104 = vrot.lane.b32.xlu0 %v101, 32
    %v105 = vpop.permute.xlu0 %104
    %v107 = vmul.f32 %v101, %v105
    %109 = vrot.lane.b32.xlu0 %v107, 32
    %v110 = vpop.permute.xlu0 %109
    %v112 = vadd.f32 %v102, %v110
    %v113 = vtanh.pop %v112
    %115 = vrot.lane.b32.xlu0 %v113, 32
    %v116 = vpop.permute.xlu0 %115
    %v118 = vmul.f32 %v101, %v116
    %s119 = sld [smem:[#allocation2 + $0x1]]
    %v120 = vstv %s119
    %v121 = vmul.f32 %v120, %v38
    %v122 = vadd.f32 %v39, %v121
    %v123 = vpack.c.bf16 %v118, %v118
    %125 = vrot.lane.b32.xlu0 %v123, 64
    %v126 = vpop.permute.xlu0 %125
    %v128 = vsel %vm53, %v126, 0
    %130 = vmatprep.subr.bf16.mxu0 0
    %131 = vmatpush1.bf16.msra.mxu0 %v47
    %132 = vmatprep.subr.bf16.mxu0 0
    %133 = vmatpush1.bf16.msra.mxu0 %v48
    %134 = vmatprep.subr.bf16.mxu0 0
    %135 = vmatpush1.bf16.msra.mxu0 0
    %136 = vmatprep.subr.bf16.mxu0 0
    %137 = vmatpush1.bf16.msra.mxu0 0
    %138 = vmatprep.subr.bf16.mxu0 0
    %139 = vmatpush1.bf16.msra.mxu0 0
    %140 = vmatprep.subr.bf16.mxu0 0
    %141 = vmatpush1.bf16.msra.mxu0 0
    %142 = vmatprep.subr.bf16.mxu0 0
    %143 = vmatpush1.bf16.msra.mxu0 0
    %144 = vmatprep.subr.bf16.mxu0 0
    %145 = vmatpush1.bf16.msra.mxu0 0
    %146 = vmatprep.subr.bf16.mxu0 0
    %147 = vmatpush1.bf16.msra.mxu0 0
    %148 = vmatprep.subr.bf16.mxu0 0
    %149 = vmatpush1.bf16.msra.mxu0 0
    %150 = vmatprep.subr.bf16.mxu0 0
    %151 = vmatpush1.bf16.msra.mxu0 0
    %152 = vmatprep.subr.bf16.mxu0 0
    %153 = vmatpush1.bf16.msra.mxu0 0
    %154 = vmatprep.subr.bf16.mxu0 0
    %155 = vmatpush1.bf16.msra.mxu0 0
    %156 = vmatprep.subr.bf16.mxu0 0
    %157 = vmatpush1.bf16.msra.mxu0 0
    %158 = vmatprep.subr.bf16.mxu0 0
    %159 = vmatpush1.bf16.msra.mxu0 0
    %160 = vmatprep.subr.bf16.mxu0 0
    %161 = vmatpush1.bf16.msra.mxu0 0
    %162 = vmatprep.mubr.bf16.mxu0 0
    %163 = vmatmul.mubr.bf16.gmra.mrb[0].mxu0 %v128
    %v164 = vpop.f32.mrb[0].mxu0
    %v165 = vadd.f32 0.0, %v164
    %v166 = vpop.f32.mrb[0].mxu0
    %v167 = vpop.f32.mrb[0].mxu0
    %v168 = vpop.f32.mrb[0].mxu0
    %169 = vdwg.mxu0
    %v170 = vadd.f32 %v122, %v165
    %v171 = vmul.f32 %v40, %v170
    %v172 = vtanh.pop %v171
    %v173 = vmul.f32 %v41, %v172
    %v174 = vadd.f32 %v173, %v42
    %v175 = vmul.f32 %v174, %v112
    %177 = vrot.lane.b32.xlu0 %v174, 32
    %v178 = vpop.permute.xlu0 %177
    %v180 = vmul.f32 %v174, %v178
    %182 = vrot.lane.b32.xlu0 %v180, 32
    %v183 = vpop.permute.xlu0 %182
    %v185 = vadd.f32 %v175, %v183
    %v186 = vtanh.pop %v185
    %188 = vrot.lane.b32.xlu0 %v186, 32
    %v189 = vpop.permute.xlu0 %188
    %v191 = vmul.f32 %v174, %v189
    %s192 = sld [smem:[#allocation2 + $0x2]]
    %v193 = vstv %s192
    %v194 = vmul.f32 %v193, %v38
    %v195 = vadd.f32 %v39, %v194
    %v196 = vpack.c.bf16 %v191, %v191
    %198 = vrot.lane.b32.xlu0 %v196, 64
    %v199 = vpop.permute.xlu0 %198
    %v201 = vsel %vm53, %v199, 0
    %203 = vmatprep.subr.bf16.mxu0 0
    %204 = vmatpush1.bf16.msra.mxu0 %v47
    %205 = vmatprep.subr.bf16.mxu0 0
    %206 = vmatpush1.bf16.msra.mxu0 %v48
    %207 = vmatprep.subr.bf16.mxu0 0
    %208 = vmatpush1.bf16.msra.mxu0 0
    %209 = vmatprep.subr.bf16.mxu0 0
    %210 = vmatpush1.bf16.msra.mxu0 0
    %211 = vmatprep.subr.bf16.mxu0 0
    %212 = vmatpush1.bf16.msra.mxu0 0
    %213 = vmatprep.subr.bf16.mxu0 0
    %214 = vmatpush1.bf16.msra.mxu0 0
    %215 = vmatprep.subr.bf16.mxu0 0
    %216 = vmatpush1.bf16.msra.mxu0 0
    %217 = vmatprep.subr.bf16.mxu0 0
    %218 = vmatpush1.bf16.msra.mxu0 0
    %219 = vmatprep.subr.bf16.mxu0 0
    %220 = vmatpush1.bf16.msra.mxu0 0
    %221 = vmatprep.subr.bf16.mxu0 0
    %222 = vmatpush1.bf16.msra.mxu0 0
    %223 = vmatprep.subr.bf16.mxu0 0
    %224 = vmatpush1.bf16.msra.mxu0 0
    %225 = vmatprep.subr.bf16.mxu0 0
    %226 = vmatpush1.bf16.msra.mxu0 0
    %227 = vmatprep.subr.bf16.mxu0 0
    %228 = vmatpush1.bf16.msra.mxu0 0
    %229 = vmatprep.subr.bf16.mxu0 0
    %230 = vmatpush1.bf16.msra.mxu0 0
    %231 = vmatprep.subr.bf16.mxu0 0
    %232 = vmatpush1.bf16.msra.mxu0 0
    %233 = vmatprep.subr.bf16.mxu0 0
    %234 = vmatpush1.bf16.msra.mxu0 0
    %235 = vmatprep.mubr.bf16.mxu0 0
    %236 = vmatmul.mubr.bf16.gmra.mrb[0].mxu0 %v201
    %v237 = vpop.f32.mrb[0].mxu0
    %v238 = vadd.f32 0.0, %v237
    %v239 = vpop.f32.mrb[0].mxu0
    %v240 = vpop.f32.mrb[0].mxu0
    %v241 = vpop.f32.mrb[0].mxu0
    %242 = vdwg.mxu0
    %v243 = vadd.f32 %v195, %v238
    %v244 = vmul.f32 %v40, %v243
    %v245 = vtanh.pop %v244
    %v246 = vmul.f32 %v41, %v245
    %v247 = vadd.f32 %v246, %v42
    %v248 = vmul.f32 %v247, %v185
    %250 = vrot.lane.b32.xlu0 %v247, 32
    %v251 = vpop.permute.xlu0 %250
    %v253 = vmul.f32 %v247, %v251
    %255 = vrot.lane.b32.xlu0 %v253, 32
    %v256 = vpop.permute.xlu0 %255
    %v258 = vadd.f32 %v248, %v256
    %v259 = vtanh.pop %v258
    %261 = vrot.lane.b32.xlu0 %v259, 32
    %v262 = vpop.permute.xlu0 %261
    %v264 = vmul.f32 %v247, %v262
    %s265 = sld [smem:[#allocation2 + $0x3]]
    %v266 = vstv %s265
    %v267 = vmul.f32 %v266, %v38
    %v268 = vadd.f32 %v39, %v267
    %v269 = vpack.c.bf16 %v264, %v264
    %271 = vrot.lane.b32.xlu0 %v269, 64
    %v272 = vpop.permute.xlu0 %271
    %v274 = vsel %vm53, %v272, 0
    %276 = vmatprep.subr.bf16.mxu0 0
    %277 = vmatpush1.bf16.msra.mxu0 %v47
    %278 = vmatprep.subr.bf16.mxu0 0
    %279 = vmatpush1.bf16.msra.mxu0 %v48
    %280 = vmatprep.subr.bf16.mxu0 0
    %281 = vmatpush1.bf16.msra.mxu0 0
    %282 = vmatprep.subr.bf16.mxu0 0
    %283 = vmatpush1.bf16.msra.mxu0 0
    %284 = vmatprep.subr.bf16.mxu0 0
    %285 = vmatpush1.bf16.msra.mxu0 0
    %286 = vmatprep.subr.bf16.mxu0 0
    %287 = vmatpush1.bf16.msra.mxu0 0
    %288 = vmatprep.subr.bf16.mxu0 0
    %289 = vmatpush1.bf16.msra.mxu0 0
    %290 = vmatprep.subr.bf16.mxu0 0
    %291 = vmatpush1.bf16.msra.mxu0 0
    %292 = vmatprep.subr.bf16.mxu0 0
    %293 = vmatpush1.bf16.msra.mxu0 0
    %294 = vmatprep.subr.bf16.mxu0 0
    %295 = vmatpush1.bf16.msra.mxu0 0
    %296 = vmatprep.subr.bf16.mxu0 0
    %297 = vmatpush1.bf16.msra.mxu0 0
    %298 = vmatprep.subr.bf16.mxu0 0
    %299 = vmatpush1.bf16.msra.mxu0 0
    %300 = vmatprep.subr.bf16.mxu0 0
    %301 = vmatpush1.bf16.msra.mxu0 0
    %302 = vmatprep.subr.bf16.mxu0 0
    %303 = vmatpush1.bf16.msra.mxu0 0
    %304 = vmatprep.subr.bf16.mxu0 0
    %305 = vmatpush1.bf16.msra.mxu0 0
    %306 = vmatprep.subr.bf16.mxu0 0
    %307 = vmatpush1.bf16.msra.mxu0 0
    %308 = vmatprep.mubr.bf16.mxu0 0
    %309 = vmatmul.mubr.bf16.gmra.mrb[0].mxu0 %v274
    %v310 = vpop.f32.mrb[0].mxu0
    %v311 = vadd.f32 0.0, %v310
    %v312 = vpop.f32.mrb[0].mxu0
    %v313 = vpop.f32.mrb[0].mxu0
    %v314 = vpop.f32.mrb[0].mxu0
    %315 = vdwg.mxu0
    %v316 = vadd.f32 %v268, %v311
    %v317 = vmul.f32 %v40, %v316
    %v318 = vtanh.pop %v317
    %v319 = vmul.f32 %v41, %v318
    %v320 = vadd.f32 %v319, %v42
    %v321 = vmul.f32 %v320, %v258
    %323 = vrot.lane.b32.xlu0 %v320, 32
    %v324 = vpop.permute.xlu0 %323
    %v326 = vmul.f32 %v320, %v324
    %328 = vrot.lane.b32.xlu0 %v326, 32
    %v329 = vpop.permute.xlu0 %328
    %v331 = vadd.f32 %v321, %v329
    %v332 = vtanh.pop %v331
    %334 = vrot.lane.b32.xlu0 %v332, 32
    %v335 = vpop.permute.xlu0 %334
    %v337 = vmul.f32 %v320, %v335
    %s338 = sld [smem:[#allocation2 + $0x4]]
    %v339 = vstv %s338
    %v340 = vmul.f32 %v339, %v38
    %v341 = vadd.f32 %v39, %v340
    %v342 = vpack.c.bf16 %v337, %v337
    %344 = vrot.lane.b32.xlu0 %v342, 64
    %v345 = vpop.permute.xlu0 %344
    %v347 = vsel %vm53, %v345, 0
    %349 = vmatprep.subr.bf16.mxu0 0
    %350 = vmatpush1.bf16.msra.mxu0 %v47
    %351 = vmatprep.subr.bf16.mxu0 0
    %352 = vmatpush1.bf16.msra.mxu0 %v48
    %353 = vmatprep.subr.bf16.mxu0 0
    %354 = vmatpush1.bf16.msra.mxu0 0
    %355 = vmatprep.subr.bf16.mxu0 0
    %356 = vmatpush1.bf16.msra.mxu0 0
    %357 = vmatprep.subr.bf16.mxu0 0
    %358 = vmatpush1.bf16.msra.mxu0 0
    %359 = vmatprep.subr.bf16.mxu0 0
    %360 = vmatpush1.bf16.msra.mxu0 0
    %361 = vmatprep.subr.bf16.mxu0 0
    %362 = vmatpush1.bf16.msra.mxu0 0
    %363 = vmatprep.subr.bf16.mxu0 0
    %364 = vmatpush1.bf16.msra.mxu0 0
    %365 = vmatprep.subr.bf16.mxu0 0
    %366 = vmatpush1.bf16.msra.mxu0 0
    %367 = vmatprep.subr.bf16.mxu0 0
    %368 = vmatpush1.bf16.msra.mxu0 0
    %369 = vmatprep.subr.bf16.mxu0 0
    %370 = vmatpush1.bf16.msra.mxu0 0
    %371 = vmatprep.subr.bf16.mxu0 0
    %372 = vmatpush1.bf16.msra.mxu0 0
    %373 = vmatprep.subr.bf16.mxu0 0
    %374 = vmatpush1.bf16.msra.mxu0 0
    %375 = vmatprep.subr.bf16.mxu0 0
    %376 = vmatpush1.bf16.msra.mxu0 0
    %377 = vmatprep.subr.bf16.mxu0 0
    %378 = vmatpush1.bf16.msra.mxu0 0
    %379 = vmatprep.subr.bf16.mxu0 0
    %380 = vmatpush1.bf16.msra.mxu0 0
    %381 = vmatprep.mubr.bf16.mxu0 0
    %382 = vmatmul.mubr.bf16.gmra.mrb[0].mxu0 %v347
    %v383 = vpop.f32.mrb[0].mxu0
    %v384 = vadd.f32 0.0, %v383
    %v385 = vpop.f32.mrb[0].mxu0
    %v386 = vpop.f32.mrb[0].mxu0
    %v387 = vpop.f32.mrb[0].mxu0
    %388 = vdwg.mxu0
    %v389 = vadd.f32 %v341, %v384
    %v390 = vmul.f32 %v40, %v389
    %v391 = vtanh.pop %v390
    %v392 = vmul.f32 %v41, %v391
    %v393 = vadd.f32 %v392, %v42
    %v394 = vmul.f32 %v393, %v331
    %396 = vrot.lane.b32.xlu0 %v393, 32
    %v397 = vpop.permute.xlu0 %396
    %v399 = vmul.f32 %v393, %v397
    %401 = vrot.lane.b32.xlu0 %v399, 32
    %v402 = vpop.permute.xlu0 %401
    %v404 = vadd.f32 %v394, %v402
    %v405 = vtanh.pop %v404
    %407 = vrot.lane.b32.xlu0 %v405, 32
    %v408 = vpop.permute.xlu0 %407
    %v410 = vmul.f32 %v393, %v408
    %s411 = sld [smem:[#allocation2 + $0x5]]
    %v412 = vstv %s411
    %v413 = vmul.f32 %v412, %v38
    %v414 = vadd.f32 %v39, %v413
    %v415 = vpack.c.bf16 %v410, %v410
    %417 = vrot.lane.b32.xlu0 %v415, 64
    %v418 = vpop.permute.xlu0 %417
    %v420 = vsel %vm53, %v418, 0
    %422 = vmatprep.subr.bf16.mxu0 0
    %423 = vmatpush1.bf16.msra.mxu0 %v47
    %424 = vmatprep.subr.bf16.mxu0 0
    %425 = vmatpush1.bf16.msra.mxu0 %v48
    %426 = vmatprep.subr.bf16.mxu0 0
    %427 = vmatpush1.bf16.msra.mxu0 0
    %428 = vmatprep.subr.bf16.mxu0 0
    %429 = vmatpush1.bf16.msra.mxu0 0
    %430 = vmatprep.subr.bf16.mxu0 0
    %431 = vmatpush1.bf16.msra.mxu0 0
    %432 = vmatprep.subr.bf16.mxu0 0
    %433 = vmatpush1.bf16.msra.mxu0 0
    %434 = vmatprep.subr.bf16.mxu0 0
    %435 = vmatpush1.bf16.msra.mxu0 0
    %436 = vmatprep.subr.bf16.mxu0 0
    %437 = vmatpush1.bf16.msra.mxu0 0
    %438 = vmatprep.subr.bf16.mxu0 0
    %439 = vmatpush1.bf16.msra.mxu0 0
    %440 = vmatprep.subr.bf16.mxu0 0
    %441 = vmatpush1.bf16.msra.mxu0 0
    %442 = vmatprep.subr.bf16.mxu0 0
    %443 = vmatpush1.bf16.msra.mxu0 0
    %444 = vmatprep.subr.bf16.mxu0 0
    %445 = vmatpush1.bf16.msra.mxu0 0
    %446 = vmatprep.subr.bf16.mxu0 0
    %447 = vmatpush1.bf16.msra.mxu0 0
    %448 = vmatprep.subr.bf16.mxu0 0
    %449 = vmatpush1.bf16.msra.mxu0 0
    %450 = vmatprep.subr.bf16.mxu0 0
    %451 = vmatpush1.bf16.msra.mxu0 0
    %452 = vmatprep.subr.bf16.mxu0 0
    %453 = vmatpush1.bf16.msra.mxu0 0
    %454 = vmatprep.mubr.bf16.mxu0 0
    %455 = vmatmul.mubr.bf16.gmra.mrb[0].mxu0 %v420
    %v456 = vpop.f32.mrb[0].mxu0
    %v457 = vadd.f32 0.0, %v456
    %v458 = vpop.f32.mrb[0].mxu0
    %v459 = vpop.f32.mrb[0].mxu0
    %v460 = vpop.f32.mrb[0].mxu0
    %461 = vdwg.mxu0
    %v462 = vadd.f32 %v414, %v457
    %v463 = vmul.f32 %v40, %v462
    %v464 = vtanh.pop %v463
    %v465 = vmul.f32 %v41, %v464
    %v466 = vadd.f32 %v465, %v42
    %v467 = vmul.f32 %v466, %v404
    %469 = vrot.lane.b32.xlu0 %v466, 32
    %v470 = vpop.permute.xlu0 %469
    %v472 = vmul.f32 %v466, %v470
    %474 = vrot.lane.b32.xlu0 %v472, 32
    %v475 = vpop.permute.xlu0 %474
    %v477 = vadd.f32 %v467, %v475
    %v478 = vtanh.pop %v477
    %480 = vrot.lane.b32.xlu0 %v478, 32
    %v481 = vpop.permute.xlu0 %480
    %v483 = vmul.f32 %v466, %v481
    %s484 = sld [smem:[#allocation2 + $0x6]]
    %v485 = vstv %s484
    %v486 = vmul.f32 %v485, %v38
    %v487 = vadd.f32 %v39, %v486
    %v488 = vpack.c.bf16 %v483, %v483
    %490 = vrot.lane.b32.xlu0 %v488, 64
    %v491 = vpop.permute.xlu0 %490
    %v493 = vsel %vm53, %v491, 0
    %495 = vmatprep.subr.bf16.mxu0 0
    %496 = vmatpush1.bf16.msra.mxu0 %v47
    %497 = vmatprep.subr.bf16.mxu0 0
    %498 = vmatpush1.bf16.msra.mxu0 %v48
    %499 = vmatprep.subr.bf16.mxu0 0
    %500 = vmatpush1.bf16.msra.mxu0 0
    %501 = vmatprep.subr.bf16.mxu0 0
    %502 = vmatpush1.bf16.msra.mxu0 0
    %503 = vmatprep.subr.bf16.mxu0 0
    %504 = vmatpush1.bf16.msra.mxu0 0
    %505 = vmatprep.subr.bf16.mxu0 0
    %506 = vmatpush1.bf16.msra.mxu0 0
    %507 = vmatprep.subr.bf16.mxu0 0
    %508 = vmatpush1.bf16.msra.mxu0 0
    %509 = vmatprep.subr.bf16.mxu0 0
    %510 = vmatpush1.bf16.msra.mxu0 0
    %511 = vmatprep.subr.bf16.mxu0 0
    %512 = vmatpush1.bf16.msra.mxu0 0
    %513 = vmatprep.subr.bf16.mxu0 0
    %514 = vmatpush1.bf16.msra.mxu0 0
    %515 = vmatprep.subr.bf16.mxu0 0
    %516 = vmatpush1.bf16.msra.mxu0 0
    %517 = vmatprep.subr.bf16.mxu0 0
    %518 = vmatpush1.bf16.msra.mxu0 0
    %519 = vmatprep.subr.bf16.mxu0 0
    %520 = vmatpush1.bf16.msra.mxu0 0
    %521 = vmatprep.subr.bf16.mxu0 0
    %522 = vmatpush1.bf16.msra.mxu0 0
    %523 = vmatprep.subr.bf16.mxu0 0
    %524 = vmatpush1.bf16.msra.mxu0 0
    %525 = vmatprep.subr.bf16.mxu0 0
    %526 = vmatpush1.bf16.msra.mxu0 0
    %527 = vmatprep.mubr.bf16.mxu0 0
    %528 = vmatmul.mubr.bf16.gmra.mrb[0].mxu0 %v493
    %v529 = vpop.f32.mrb[0].mxu0
    %v530 = vadd.f32 0.0, %v529
    %v531 = vpop.f32.mrb[0].mxu0
    %v532 = vpop.f32.mrb[0].mxu0
    %v533 = vpop.f32.mrb[0].mxu0
    %534 = vdwg.mxu0
    %v535 = vadd.f32 %v487, %v530
    %v536 = vmul.f32 %v40, %v535
    %v537 = vtanh.pop %v536
    %v538 = vmul.f32 %v41, %v537
    %v539 = vadd.f32 %v538, %v42
    %v540 = vmul.f32 %v539, %v477
    %542 = vrot.lane.b32.xlu0 %v539, 32
    %v543 = vpop.permute.xlu0 %542
    %v545 = vmul.f32 %v539, %v543
    %547 = vrot.lane.b32.xlu0 %v545, 32
    %v548 = vpop.permute.xlu0 %547
    %v550 = vadd.f32 %v540, %v548
    %v551 = vtanh.pop %v550
    %553 = vrot.lane.b32.xlu0 %v551, 32
    %v554 = vpop.permute.xlu0 %553
    %v556 = vmul.f32 %v539, %v554
    %s557 = sld [smem:[#allocation2 + $0x7]]
    %v558 = vstv %s557
    %v559 = vmul.f32 %v558, %v38
    %v560 = vadd.f32 %v39, %v559
    %v561 = vpack.c.bf16 %v556, %v556
    %563 = vrot.lane.b32.xlu0 %v561, 64
    %v564 = vpop.permute.xlu0 %563
    %v566 = vsel %vm53, %v564, 0
    %568 = vmatprep.subr.bf16.mxu0 0
    %569 = vmatpush1.bf16.msra.mxu0 %v47
    %570 = vmatprep.subr.bf16.mxu0 0
    %571 = vmatpush1.bf16.msra.mxu0 %v48
    %572 = vmatprep.subr.bf16.mxu0 0
    %573 = vmatpush1.bf16.msra.mxu0 0
    %574 = vmatprep.subr.bf16.mxu0 0
    %575 = vmatpush1.bf16.msra.mxu0 0
    %576 = vmatprep.subr.bf16.mxu0 0
    %577 = vmatpush1.bf16.msra.mxu0 0
    %578 = vmatprep.subr.bf16.mxu0 0
    %579 = vmatpush1.bf16.msra.mxu0 0
    %580 = vmatprep.subr.bf16.mxu0 0
    %581 = vmatpush1.bf16.msra.mxu0 0
    %582 = vmatprep.subr.bf16.mxu0 0
    %583 = vmatpush1.bf16.msra.mxu0 0
    %584 = vmatprep.subr.bf16.mxu0 0
    %585 = vmatpush1.bf16.msra.mxu0 0
    %586 = vmatprep.subr.bf16.mxu0 0
    %587 = vmatpush1.bf16.msra.mxu0 0
    %588 = vmatprep.subr.bf16.mxu0 0
    %589 = vmatpush1.bf16.msra.mxu0 0
    %590 = vmatprep.subr.bf16.mxu0 0
    %591 = vmatpush1.bf16.msra.mxu0 0
    %592 = vmatprep.subr.bf16.mxu0 0
    %593 = vmatpush1.bf16.msra.mxu0 0
    %594 = vmatprep.subr.bf16.mxu0 0
    %595 = vmatpush1.bf16.msra.mxu0 0
    %596 = vmatprep.subr.bf16.mxu0 0
    %597 = vmatpush1.bf16.msra.mxu0 0
    %598 = vmatprep.subr.bf16.mxu0 0
    %599 = vmatpush1.bf16.msra.mxu0 0
    %600 = vmatprep.mubr.bf16.mxu0 0
    %601 = vmatmul.mubr.bf16.gmra.mrb[0].mxu0 %v566
    %v602 = vpop.f32.mrb[0].mxu0
    %v603 = vadd.f32 0.0, %v602
    %v604 = vpop.f32.mrb[0].mxu0
    %v605 = vpop.f32.mrb[0].mxu0
    %v606 = vpop.f32.mrb[0].mxu0
    %607 = vdwg.mxu0
    %v608 = vadd.f32 %v560, %v603
    %v609 = vmul.f32 %v40, %v608
    %v610 = vtanh.pop %v609
    %v611 = vmul.f32 %v41, %v610
    %v612 = vadd.f32 %v611, %v42
    %v613 = vmul.f32 %v612, %v550
    %615 = vrot.lane.b32.xlu0 %v612, 32
    %v616 = vpop.permute.xlu0 %615
    %v618 = vmul.f32 %v612, %v616
    %620 = vrot.lane.b32.xlu0 %v618, 32
    %v621 = vpop.permute.xlu0 %620
    %v623 = vadd.f32 %v613, %v621
    %v624 = vtanh.pop %v623
    %626 = vrot.lane.b32.xlu0 %v624, 32
    %v627 = vpop.permute.xlu0 %626
    %v629 = vmul.f32 %v612, %v627
    %v630 = vld [vmem:[#allocation6 + $0x2] sm:$0x1]
    %v631 = vld [vmem:[#allocation6 + $0x3] sm:$0x1]
    %633 = vrot.lane.b32.xlu0 %v630, 64
    %v634 = vpop.permute.xlu0 %633
    %v636 = vmul.f32 %v629, %v634
    %638 = vrot.lane.b32.xlu0 %v636, 64
    %v639 = vpop.permute.xlu0 %638
    %vm641 = vcmask 253952
    %v642 = vsel %vm641, %v639, 0.0
    %643 = vadd.xlane.f32.xlu0 %v642
    %v644 = vpop.xlane.xlu0 %643
    %v645 = vadd.f32 %v644, %v631
    %vm646 = vcmask 0
    %647 = vst.msk [vmem:[#allocation7] sm:$0x1] %vm646, %v645
    // Predicated region
    $region18: #{tpu_custom_call.1} parent=1 // pred_check
      _
    $region19: #{tpu_custom_call.1} parent=1 // pred_check_branch
      %649 = sbr.rel (0) target = $region21
    $region20: #{tpu_custom_call.1} parent=1 // pred_region
      %s651 = ssub.s32 16, 16
      %652 = vsyncadd [#allocation4], %s651
      %s654 = sshll.u32 [#allocation7], 4
      %s655 = int_to_ptr.vmem [resolvable:$true] %s654
      %657 = dma.vmem_to_hbm [thread:$0]  %s655, 16, %s2, [#allocation4]
    $region21: #{tpu_custom_call.1} parent=1 // pred_fallthru
      _
    // Predicated region
    $region22: #{tpu_custom_call.1} parent=1 // pred_check
      _
    $region23: #{tpu_custom_call.1} parent=1 // pred_check_branch
      %659 = sbr.rel (0) target = $region25
    $region24: #{tpu_custom_call.1} parent=1 // pred_region
      %660 = dma.done [#allocation4], 16
    $region25: #{tpu_custom_call.1} parent=1 // pred_fallthru
      _
    %661 = vsyncpa [#allocation3], 1
    %662 = vsyncpa [#allocation4], 1
    %663 = vsyncpa [#allocation5], 1

</llo_original>
